<compile_context>
chip_gen: v7x
topology: tpu7x:2x2x1
jax: 0.10.0
libtpu: 0.0.40
codegen_flags: <defaults>
</compile_context>

<pallas_src>
import functools
import math

import jax
import jax.numpy as jnp
from jax.experimental import pallas as pl
from jax.experimental.pallas import tpu as pltpu


# ---------------------------------------------------------------------------
# Kernels
# ---------------------------------------------------------------------------
def pe_add_tile_kernel(x_ref, pe_ref, o_ref):
    """Tiled path: x_ref / o_ref are (TS, D) views of one batch row's tile,
    pe_ref is the matching (TS, D) slice of the sinusoid table (f32)."""
    x = x_ref[...].astype(jnp.float32)
    o_ref[...] = (x + pe_ref[...]).astype(o_ref.dtype)


def pe_add_full_kernel(x_ref, pe_ref, o_ref, *, seq_len):
    """Fast path: whole (B, S, D) x and whole (L, D) table resident in VMEM."""
    x = x_ref[...].astype(jnp.float32)
    pe = pe_ref[0:seq_len, :][None, :, :]          # static slice, first S rows
    o_ref[...] = (x + pe).astype(o_ref.dtype)


# ---------------------------------------------------------------------------
# Table construction (exact re-creation of the PyTorch `pe` buffer)
# ---------------------------------------------------------------------------
def make_sinusoid_table(max_seq_length, d_model):
    position = jnp.arange(max_seq_length, dtype=jnp.float32)[:, None]
    div_term = jnp.exp(
        jnp.arange(0, d_model, 2, dtype=jnp.float32)
        * (-math.log(10000.0) / d_model)
    )
    pe = jnp.zeros((max_seq_length, d_model), dtype=jnp.float32)
    pe = pe.at[:, 0::2].set(jnp.sin(position * div_term))
    pe = pe.at[:, 1::2].set(jnp.cos(position * div_term))
    return pe


# ---------------------------------------------------------------------------
# Tile sizing
# ---------------------------------------------------------------------------
def _choose_seq_tile(seq_len, d_model, x_itemsize):
    """Sequence-tile size: dtype-aware sublane multiple, ~12 MiB total
    double-buffered footprint (safe on v5e's 16 MiB default scoped VMEM and
    far under v6e/v7x defaults)."""
    sublane = max(8, 8 * (4 // max(1, x_itemsize)))       # 8 f32 / 16 bf16 / 32 int8
    budget_total = 12 * 1024 * 1024
    per_row_bytes = d_model * (2 * x_itemsize + 4)        # x tile + out tile + f32 PE
    ts = budget_total // (2 * per_row_bytes)              # x2: double buffering
    ts = max(sublane, (ts // sublane) * sublane)
    seq_rounded = ((seq_len + sublane - 1) // sublane) * sublane
    return min(ts, seq_rounded)


# ---------------------------------------------------------------------------
# Wrapper
# ---------------------------------------------------------------------------
def positional_encoding(x, pe_table, *, allow_fast_path=True):
    """x: (B, S, D); pe_table: (L, D) f32 with L >= S. Returns x + pe[:S]."""
    B, S, D = x.shape
    L, Dp = pe_table.shape
    assert Dp == D, f"pe_table d_model {Dp} != x d_model {D}"
    assert S <= L, f"sequence length {S} exceeds max_seq_length {L}"

    x_itemsize = jnp.dtype(x.dtype).itemsize

    # ---- Fast path: single block, no grid overhead / partial stores. -------
    total_bytes = B * S * D * (2 * x_itemsize) + L * D * 4
    if allow_fast_path and total_bytes <= 4 * 1024 * 1024:
        return pl.pallas_call(
            functools.partial(pe_add_full_kernel, seq_len=S),
            out_shape=jax.ShapeDtypeStruct((B, S, D), x.dtype),
            grid_spec=pl.GridSpec(
                grid=(1,),
                in_specs=[
                    pl.BlockSpec((B, S, D), lambda i: (0, 0, 0)),
                    pl.BlockSpec((L, D), lambda i: (0, 0)),
                ],
                out_specs=pl.BlockSpec((B, S, D), lambda i: (0, 0, 0)),
            ),
        )(x, pe_table)

    # ---- General tiled path. -----------------------------------------------
    ts = _choose_seq_tile(S, D, x_itemsize)
    num_s_tiles = pl.cdiv(S, ts)
    # Batch innermost: PE block index (s, 0) is constant across the inner
    # loop, so its tile stays VMEM-resident and is DMA'd once per s tile.
    grid = (num_s_tiles, B)

    return pl.pallas_call(
        pe_add_tile_kernel,
        out_shape=jax.ShapeDtypeStruct((B, S, D), x.dtype),
        grid_spec=pl.GridSpec(
            grid=grid,
            in_specs=[
                pl.BlockSpec((pl.Squeezed(), ts, D), lambda s, b: (b, s, 0)),
                pl.BlockSpec((ts, D), lambda s, b: (s, 0)),
            ],
            out_specs=pl.BlockSpec(
                (pl.Squeezed(), ts, D), lambda s, b: (b, s, 0)
            ),
        ),
        compiler_params=pltpu.CompilerParams(
            dimension_semantics=("parallel", "parallel"),
        ),
    )(x, pe_table)


# ---------------------------------------------------------------------------
# Reference + smoke test
# ---------------------------------------------------------------------------
def reference_positional_encoding(x, pe_table):
    _, S, _ = x.shape
    return x + pe_table[None, :S, :]


if __name__ == "__main__":
    batch, seq, d_model = 2, 8, 512
    max_seq_length = 100

    key = jax.random.PRNGKey(0)
    x = jax.random.normal(key, (batch, seq, d_model), dtype=jnp.float32)
    pe_table = make_sinusoid_table(max_seq_length, d_model)

    ref = reference_positional_encoding(x, pe_table)

    # Fast (single-block) path — used for these tiny shapes.
    out_fast = jax.block_until_ready(positional_encoding(x, pe_table))
    assert out_fast.shape == x.shape and out_fast.dtype == x.dtype
    assert jnp.allclose(out_fast, ref, atol=1e-5, rtol=1e-5), "fast path mismatch"

    # Tiled path — force it so the production code path is also exercised.
    out_tiled = jax.block_until_ready(
        positional_encoding(x, pe_table, allow_fast_path=False)
    )
    assert out_tiled.shape == x.shape and out_tiled.dtype == x.dtype
    assert jnp.allclose(out_tiled, ref, atol=1e-5, rtol=1e-5), "tiled path mismatch"

    print("KERNEL_OK")
</pallas_src>

<mosaic_0001>
module attributes {stable_mosaic.version = 11 : i64} {
  func.func @pe_add_full_kernel(%arg0: i32, %arg1: memref<2x8x512xf32, #tpu.memory_space<vmem>>, %arg2: memref<100x512xf32, #tpu.memory_space<vmem>>, %arg3: memref<2x8x512xf32, #tpu.memory_space<vmem>>) attributes {dimension_semantics = [#tpu.dimension_semantics<arbitrary>], iteration_bounds = array<i64: 1>, scalar_prefetch = 0 : i64, scratch_operands = 0 : i64, tpu.core_type = #tpu.core_type<tc>, window_params = [{pipeline_mode = #tpu.pipeline_mode<synchronous>, transform_indices = @transform_0, window_bounds = array<i64: 2, 8, 512>}, {pipeline_mode = #tpu.pipeline_mode<synchronous>, transform_indices = @transform_1, window_bounds = array<i64: 100, 512>}, {pipeline_mode = #tpu.pipeline_mode<synchronous>, transform_indices = @transform_2, window_bounds = array<i64: 2, 8, 512>}]} {
    %c0 = arith.constant 0 : index
    %c0_0 = arith.constant 0 : index
    %c0_1 = arith.constant 0 : index
    %0 = vector.load %arg1[%c0, %c0_0, %c0_1] : memref<2x8x512xf32, #tpu.memory_space<vmem>>, vector<2x8x512xf32>
    %c0_2 = arith.constant 0 : index
    %c0_3 = arith.constant 0 : index
    %1 = vector.load %arg2[%c0_2, %c0_3] : memref<100x512xf32, #tpu.memory_space<vmem>>, vector<8x512xf32>
    %2 = vector.shape_cast %1 : vector<8x512xf32> to vector<1x8x512xf32>
    %3 = vector.broadcast %2 : vector<1x8x512xf32> to vector<2x8x512xf32>
    %4 = arith.addf %0, %3 : vector<2x8x512xf32>
    %c0_4 = arith.constant 0 : index
    %c0_5 = arith.constant 0 : index
    %c0_6 = arith.constant 0 : index
    %5 = vector.load %arg3[%c0_4, %c0_5, %c0_6] : memref<2x8x512xf32, #tpu.memory_space<vmem>>, vector<2x8x512xf32>
    tpu.vector_store %arg3[%c0_4, %c0_5, %c0_6], %4 {strides = array<i32>} : memref<2x8x512xf32, #tpu.memory_space<vmem>>, vector<2x8x512xf32>,
    return
  }
  func.func @transform_0(%arg0: i32) -> (i32, i32, i32) {
    %c0_i32 = arith.constant 0 : i32
    %c0_i32_0 = arith.constant 0 : i32
    %c0_i32_1 = arith.constant 0 : i32
    %c0_i32_2 = arith.constant 0 : i32
    return %c0_i32, %c0_i32_0, %c0_i32_1 : i32, i32, i32
  }
  func.func @transform_1(%arg0: i32) -> (i32, i32) {
    %c0_i32 = arith.constant 0 : i32
    %c0_i32_0 = arith.constant 0 : i32
    %c0_i32_1 = arith.constant 0 : i32
    return %c0_i32, %c0_i32_0 : i32, i32
  }
  func.func @transform_2(%arg0: i32) -> (i32, i32, i32) {
    %c0_i32 = arith.constant 0 : i32
    %c0_i32_0 = arith.constant 0 : i32
    %c0_i32_1 = arith.constant 0 : i32
    %c0_i32_2 = arith.constant 0 : i32
    return %c0_i32, %c0_i32_0, %c0_i32_1 : i32, i32, i32
  }
}

</mosaic_0001>

<llo_original>
// kernel: tpu_custom_call.1
$region0: #{tpu_custom_call.1}
  #allocation0 [shape = 'u32[]', space=smem, size = 0x4, offset = 0x4, fixed_abs, tag = 'smem constant byte address 0x4 - core index']
  #allocation1 [shape = 'u32[144,128]{1,0:T(1,128)}', space=vmem, size = 0x12000, scoped, tag = 'internal scratch']
  %s0 = inlined_call_operand.hbm [shape: f32[2,8,512], index: 0, kind: input, shape index: {}]
  %s1 = inlined_call_operand.hbm [shape: f32[100,512], index: 1, kind: input, shape index: {}]
  %s2 = inlined_call_operand.hbm [shape: f32[2,8,512], index: 2, kind: output, shape index: {}]
  %s3 = sld [smem:[#allocation0]]
  $region26: #{tpu_custom_call.1} parent=0
    _
  %s5 = ssub.s32 1, %s3
  %s6 = scalar_select 0, %s5, %s3
  $region1: #{tpu_custom_call.1} parent=0
    #allocation2 [shape = 'u8[32768]{0}', space=vmem, size = 0x8000, scoped, tag = 'input window, operand 0, single buffered']
    #allocation3 [shape = 's32[1]{0}', space=sflag, size = 0x4, scoped, tag = 'scoped memory for tpu_custom_call.1']
    #allocation4 [shape = 's32[1]{0}', space=sflag, size = 0x4, scoped, tag = 'scoped memory for tpu_custom_call.1']
    #allocation5 [shape = 'u8[212992]{0}', space=vmem, size = 0x34000, scoped, tag = 'input window, operand 1, single buffered']
    #allocation6 [shape = 's32[1]{0}', space=sflag, size = 0x4, scoped, tag = 'scoped memory for tpu_custom_call.1']
    #allocation7 [shape = 'u8[32768]{0}', space=vmem, size = 0x8000, scoped, tag = 'output window, operand 0, single buffered']
    %7 = vsyncpa [#allocation3], 0
    %8 = vsyncpa [#allocation6], 0
    %9 = vsyncpa [#allocation4], 0
    // Predicated region
    $region2: #{tpu_custom_call.1} parent=1 // pred_check
      _
    $region3: #{tpu_custom_call.1} parent=1 // pred_check_branch
      %11 = sbr.rel (0) target = $region5
    $region4: #{tpu_custom_call.1} parent=1 // pred_region
      %s13 = ssub.s32 1024, 1024
      %14 = vsyncadd [#allocation3], %s13
      %s15 = sshll.u32 [#allocation2], 4
      %s16 = int_to_ptr.vmem [resolvable:$true] %s15
      %21 = dma.hbm_to_vmem [thread:$0]  %s0, 1024, %s16, [#allocation3], 512, 512, 32
    $region5: #{tpu_custom_call.1} parent=1 // pred_fallthru
      _
    // Predicated region
    $region6: #{tpu_custom_call.1} parent=1 // pred_check
      _
    $region7: #{tpu_custom_call.1} parent=1 // pred_check_branch
      %23 = sbr.rel (0) target = $region9
    $region8: #{tpu_custom_call.1} parent=1 // pred_region
      %s25 = ssub.s32 6656, 6656
      %26 = vsyncadd [#allocation6], %s25
      %s27 = sshll.u32 [#allocation5], 4
      %s28 = int_to_ptr.vmem [resolvable:$true] %s27
      %33 = dma.hbm_to_vmem [thread:$0]  %s1, 6656, %s28, [#allocation6], 512, 512, 32
    $region9: #{tpu_custom_call.1} parent=1 // pred_fallthru
      _
    // Predicated region
    $region10: #{tpu_custom_call.1} parent=1 // pred_check
      _
    $region11: #{tpu_custom_call.1} parent=1 // pred_check_branch
      %35 = sbr.rel (0) target = $region13
    $region12: #{tpu_custom_call.1} parent=1 // pred_region
      %36 = dma.done [#allocation3], 1024
    $region13: #{tpu_custom_call.1} parent=1 // pred_fallthru
      _
    // Predicated region
    $region14: #{tpu_custom_call.1} parent=1 // pred_check
      _
    $region15: #{tpu_custom_call.1} parent=1 // pred_check_branch
      %38 = sbr.rel (0) target = $region17
    $region16: #{tpu_custom_call.1} parent=1 // pred_region
      %39 = dma.done [#allocation6], 6656
    $region17: #{tpu_custom_call.1} parent=1 // pred_fallthru
      _
    %v40 = vld [vmem:[#allocation2] sm:$0xff]
    %v41 = vld [vmem:[#allocation2 + $0x8] sm:$0xff]
    %v42 = vld [vmem:[#allocation2 + $0x10] sm:$0xff]
    %v43 = vld [vmem:[#allocation2 + $0x18] sm:$0xff]
    %v44 = vld [vmem:[#allocation2 + $0x20] sm:$0xff]
    %v45 = vld [vmem:[#allocation2 + $0x28] sm:$0xff]
    %v46 = vld [vmem:[#allocation2 + $0x30] sm:$0xff]
    %v47 = vld [vmem:[#allocation2 + $0x38] sm:$0xff]
    %v48 = vld [vmem:[#allocation5] sm:$0xff]
    %v49 = vld [vmem:[#allocation5 + $0x8] sm:$0xff]
    %v50 = vld [vmem:[#allocation5 + $0x10] sm:$0xff]
    %v51 = vld [vmem:[#allocation5 + $0x18] sm:$0xff]
    %v52 = vadd.f32 %v40, %v48
    %v53 = vadd.f32 %v41, %v49
    %v54 = vadd.f32 %v42, %v50
    %v55 = vadd.f32 %v43, %v51
    %v56 = vadd.f32 %v44, %v48
    %v57 = vadd.f32 %v45, %v49
    %v58 = vadd.f32 %v46, %v50
    %v59 = vadd.f32 %v47, %v51
    %60 = vst [vmem:[#allocation7] sm:$0xff] %v52
    %61 = vst [vmem:[#allocation7 + $0x8] sm:$0xff] %v53
    %62 = vst [vmem:[#allocation7 + $0x10] sm:$0xff] %v54
    %63 = vst [vmem:[#allocation7 + $0x18] sm:$0xff] %v55
    %64 = vst [vmem:[#allocation7 + $0x20] sm:$0xff] %v56
    %65 = vst [vmem:[#allocation7 + $0x28] sm:$0xff] %v57
    %66 = vst [vmem:[#allocation7 + $0x30] sm:$0xff] %v58
    %67 = vst [vmem:[#allocation7 + $0x38] sm:$0xff] %v59
    // Predicated region
    $region18: #{tpu_custom_call.1} parent=1 // pred_check
      _
    $region19: #{tpu_custom_call.1} parent=1 // pred_check_branch
      %69 = sbr.rel (0) target = $region21
    $region20: #{tpu_custom_call.1} parent=1 // pred_region
      %s71 = ssub.s32 1024, 1024
      %72 = vsyncadd [#allocation4], %s71
      %s73 = sshll.u32 [#allocation7], 4
      %s74 = int_to_ptr.vmem [resolvable:$true] %s73
      %79 = dma.vmem_to_hbm [thread:$0]  %s74, 1024, %s2, [#allocation4], 512, 512, 32
    $region21: #{tpu_custom_call.1} parent=1 // pred_fallthru
      _
    // Predicated region
    $region22: #{tpu_custom_call.1} parent=1 // pred_check
      _
    $region23: #{tpu_custom_call.1} parent=1 // pred_check_branch
      %81 = sbr.rel (0) target = $region25
    $region24: #{tpu_custom_call.1} parent=1 // pred_region
      %82 = dma.done [#allocation4], 1024
    $region25: #{tpu_custom_call.1} parent=1 // pred_fallthru
      _
    %83 = vsyncpa [#allocation3], 1
    %84 = vsyncpa [#allocation6], 1
    %85 = vsyncpa [#allocation4], 1

</llo_original>
